<compile_context>
chip_gen: v7x
topology: tpu7x:2x2x1
jax: 0.10.0
libtpu: 0.0.40
codegen_flags: <defaults>
</compile_context>

<pallas_src>
import jax
import jax.numpy as jnp
from jax.experimental import pallas as pl
from jax.experimental.pallas import tpu as pltpu


def _round_up(x, m):
    return ((x + m - 1) // m) * m


def _pick_tile_n(n_pad, cap=512):
    """Largest multiple of 128 (<= cap) that divides n_pad."""
    t = min(cap, n_pad)
    while n_pad % t != 0:
        t -= 128
    return t


def _vmem_capacity_bytes():
    try:
        return int(pltpu.get_tpu_info().vmem_capacity_bytes)
    except Exception:
        return 64 * 1024 * 1024  # conservative fallback: v7x per-TC capacity


# ---------------------------------------------------------------------------
# Kernel 1: per-graph projection (hoisted out of the attention loop).
#   h     = x @ W^T        -> stored as bf16 for the aggregation matmul
#   a_src = sum(h * att_src, -1)   (TILE_M, 1), f32
#   a_dst = sum(h * att_dst, -1)   (TILE_M, 1), f32
# ---------------------------------------------------------------------------
def _project_kernel(x_ref, w_ref, asrc_ref, adst_ref,
                    h_ref, asrc_out_ref, adst_out_ref):
    h = jnp.dot(x_ref[...], w_ref[...], preferred_element_type=jnp.float32)
    h_ref[...] = h.astype(h_ref.dtype)   # bf16 writeback (half HBM traffic)
    # VPU multiply + lane reduce on the f32 h (keeps attention logits f32).
    asrc_out_ref[...] = jnp.sum(h * asrc_ref[...], axis=-1, keepdims=True)
    adst_out_ref[...] = jnp.sum(h * adst_ref[...], axis=-1, keepdims=True)
    # TODO(synk): emit a_src directly as a lane-dense (1, TILE_M) row block to
    # avoid the lane-width-1 store + host reshape (needs an in-kernel
    # transposed contraction); negligible at these sizes.


# ---------------------------------------------------------------------------
# Kernel 2: row x source tiled GAT attention with online softmax.
# grid = (n_pad // TILE_M, n_pad // TILE_N); source axis is the reduction.
# ---------------------------------------------------------------------------
def _breadth_kernel(adj_ref, h_ref, asrc_ref, adst_ref, bias_ref,
                    out_ref, m_ref, l_ref, acc_ref):
    k = pl.program_id(1)

    @pl.when(k == 0)
    def _init():
        m_ref[...] = jnp.full(m_ref.shape, -jnp.inf, jnp.float32)
        l_ref[...] = jnp.zeros(l_ref.shape, jnp.float32)
        acc_ref[...] = jnp.zeros(acc_ref.shape, jnp.float32)

    # e[i, j] = LeakyReLU(a_dst[i] + a_src[j], 0.2); masked entries -> -1e30.
    e = adst_ref[...] + asrc_ref[...]                 # (TILE_M, TILE_N)
    e = jnp.maximum(e, 0.2 * e)                       # LeakyReLU, 1 mul + 1 max
    e = jnp.where(adj_ref[...] > 0, e, jnp.float32(-1e30))

    # Online softmax update (self-loops guarantee a finite row max overall;
    # tiles with no edges for a row contribute mass that is wiped by alpha=0
    # once a real edge is seen, and padded rows are sliced off at the end).
    m_prev = m_ref[...]
    m_new = jnp.maximum(m_prev, jnp.max(e, axis=-1, keepdims=True))
    alpha = jnp.exp(m_prev - m_new)
    p = jnp.exp(e - m_new)                            # (TILE_M, TILE_N), f32

    l_ref[...] = alpha * l_ref[...] + jnp.sum(p, axis=-1, keepdims=True)
    # Deferred normalization: accumulate un-normalized p @ h (bf16 MXU).
    acc_ref[...] = alpha * acc_ref[...] + jnp.dot(
        p.astype(h_ref.dtype), h_ref[...], preferred_element_type=jnp.float32)
    m_ref[...] = m_new

    @pl.when(k == pl.num_programs(1) - 1)
    def _finalize():
        l = l_ref[...]
        # EUP approximate reciprocal + one Newton step (~1e-7 rel. error).
        r = pl.reciprocal(l, approx=True)
        r = r * (2.0 - l * r)
        out_ref[...] = jnp.tanh(acc_ref[...] * r + bias_ref[...])


def breadth_forward(x, edge_index, w_t, att_src, att_dst, bias, *, tile_m=128):
    """x: [N, in_dim]; edge_index: [2, E] int32 (row 0 = src, row 1 = dst)."""
    n, in_dim = x.shape
    out_dim = w_t.shape[1]

    # --- padding for TPU-friendly layouts ------------------------------------
    n_pad = max(tile_m, _round_up(n, tile_m))      # rows: multiple of the tile
    f_pad = _round_up(out_dim, 128)                # lane-dense feature dim
    tile_n = _pick_tile_n(n_pad)                   # source-dimension tile

    x_p = jnp.zeros((n_pad, in_dim), jnp.float32).at[:n, :].set(x)
    w_p = jnp.zeros((in_dim, f_pad), jnp.float32).at[:, :out_dim].set(w_t)
    asrc_p = jnp.zeros((1, f_pad), jnp.float32).at[:, :out_dim].set(att_src)
    adst_p = jnp.zeros((1, f_pad), jnp.float32).at[:, :out_dim].set(att_dst)
    bias_p = jnp.zeros((1, f_pad), jnp.float32).at[:, :out_dim].set(bias)

    # Dense int8 adjacency mask: adj[i, j] = 1 iff edge j -> i, plus self loops.
    # TODO(synk): cache this across calls when the graph is static (GeniePath
    # reuses the same edge_index across layers/steps), and for genuinely large
    # sparse graphs replace it with CSR offsets + PrefetchScalarGridSpec gather
    # (O(E) instead of O(N^2)).  Bit-packing (1 bit/edge) is a further option
    # if adj DMA shows up exposed on v6e.
    src = edge_index[0]
    dst = edge_index[1]
    diag = jnp.arange(n)
    adj = jnp.zeros((n_pad, n_pad), jnp.int8)
    adj = adj.at[dst, src].set(1)
    adj = adj.at[diag, diag].set(1)

    grid_rows = n_pad // tile_m
    grid_src = n_pad // tile_n

    # --- kernel 1: projection (hoisted, row-tiled, parallel) ------------------
    h, a_src_col, a_dst_col = pl.pallas_call(
        _project_kernel,
        out_shape=(
            jax.ShapeDtypeStruct((n_pad, f_pad), jnp.bfloat16),   # h (bf16)
            jax.ShapeDtypeStruct((n_pad, 1), jnp.float32),
            jax.ShapeDtypeStruct((n_pad, 1), jnp.float32),
        ),
        grid_spec=pltpu.PrefetchScalarGridSpec(
            num_scalar_prefetch=0,
            grid=(grid_rows,),
            in_specs=[
                pl.BlockSpec((tile_m, in_dim), lambda i: (i, 0)),   # x tile
                pl.BlockSpec((in_dim, f_pad), lambda i: (0, 0)),    # W^T
                pl.BlockSpec((1, f_pad), lambda i: (0, 0)),         # att_src
                pl.BlockSpec((1, f_pad), lambda i: (0, 0)),         # att_dst
            ],
            out_specs=(
                pl.BlockSpec((tile_m, f_pad), lambda i: (i, 0)),    # h
                pl.BlockSpec((tile_m, 1), lambda i: (i, 0)),        # a_src col
                pl.BlockSpec((tile_m, 1), lambda i: (i, 0)),        # a_dst col
            ),
        ),
        compiler_params=pltpu.CompilerParams(
            dimension_semantics=("parallel",)),
        cost_estimate=pl.CostEstimate(
            flops=int(2 * n_pad * in_dim * f_pad + 4 * n_pad * f_pad),
            transcendentals=0,
            bytes_accessed=int(n_pad * (in_dim * 4 + f_pad * 2 + 8)
                               + in_dim * f_pad * 4)),
    )(x_p, w_p, asrc_p, adst_p)

    # tiny relayout in plain JAX: (N, 1) column -> (1, N) row of source scores
    a_src_row = a_src_col.reshape(1, n_pad)

    # --- kernel 2: tiled attention + aggregation (online softmax) -------------
    vmem_cap = _vmem_capacity_bytes()
    vmem_est = (
        2 * tile_m * tile_n * 1            # double-buffered int8 adj tile
        + 2 * tile_n * f_pad * 2           # double-buffered bf16 h tile
        + 2 * (tile_n + tile_m + f_pad) * 4  # a_src row / a_dst col / bias
        + 2 * tile_m * f_pad * 4           # double-buffered output tile
        + tile_m * f_pad * 4 + 2 * tile_m * 4  # acc / m / l scratch
        + 4 * tile_m * tile_n * 4)         # e / p / mask temporaries headroom
    vmem_limit = int(min(max(2 * vmem_est, 8 * 1024 * 1024),
                         max(int(0.75 * vmem_cap), 8 * 1024 * 1024)))

    out_full = pl.pallas_call(
        _breadth_kernel,
        out_shape=jax.ShapeDtypeStruct((n_pad, f_pad), jnp.float32),
        grid_spec=pltpu.PrefetchScalarGridSpec(
            num_scalar_prefetch=0,
            grid=(grid_rows, grid_src),
            in_specs=[
                pl.BlockSpec((tile_m, tile_n), lambda i, k: (i, k)),  # adj tile
                pl.BlockSpec((tile_n, f_pad), lambda i, k: (k, 0)),   # h tile
                pl.BlockSpec((1, tile_n), lambda i, k: (0, k)),       # a_src row
                pl.BlockSpec((tile_m, 1), lambda i, k: (i, 0)),       # a_dst col
                pl.BlockSpec((1, f_pad), lambda i, k: (0, 0)),        # bias
            ],
            out_specs=pl.BlockSpec((tile_m, f_pad), lambda i, k: (i, 0)),
            scratch_shapes=[
                pltpu.VMEM((tile_m, 1), jnp.float32),      # running max m
                pltpu.VMEM((tile_m, 1), jnp.float32),      # running denom l
                pltpu.VMEM((tile_m, f_pad), jnp.float32),  # un-normalized acc
            ],
        ),
        compiler_params=pltpu.CompilerParams(
            dimension_semantics=("parallel", "arbitrary"),
            vmem_limit_bytes=vmem_limit),
        cost_estimate=pl.CostEstimate(
            flops=int(2 * n_pad * n_pad * f_pad + 10 * n_pad * n_pad),
            transcendentals=int(n_pad * n_pad + n_pad * f_pad),
            bytes_accessed=int(n_pad * n_pad
                               + grid_rows * n_pad * f_pad * 2
                               + n_pad * f_pad * 4 + n_pad * 8)),
    )(adj, h, a_src_row, a_dst_col, bias_p)

    return out_full[:n, :out_dim]


def breadth_ref(x, edge_index, w_t, att_src, att_dst, bias):
    """Pure-JAX reference (dense GATConv, heads=1, self-loops) + tanh."""
    n = x.shape[0]
    src, dst = edge_index[0], edge_index[1]
    adj = jnp.zeros((n, n), jnp.float32).at[dst, src].set(1.0)
    diag = jnp.arange(n)
    adj = adj.at[diag, diag].set(1.0)

    h = x @ w_t
    a_src = jnp.sum(h * att_src, axis=-1)          # (N,)
    a_dst = jnp.sum(h * att_dst, axis=-1)          # (N,)
    e = a_dst[:, None] + a_src[None, :]
    e = jnp.where(e > 0, e, 0.2 * e)
    e = jnp.where(adj > 0, e, -1e30)
    p = jnp.exp(e - jnp.max(e, axis=-1, keepdims=True))
    p = jnp.where(adj > 0, p, 0.0)
    attn = p / jnp.sum(p, axis=-1, keepdims=True)
    return jnp.tanh(attn @ h + bias)


if __name__ == "__main__":
    key = jax.random.PRNGKey(0)
    N, IN_DIM, OUT_DIM = 16, 8, 16
    k1, k2, k3, k4, k5 = jax.random.split(key, 5)

    # node features
    x = jax.random.normal(k1, (N, IN_DIM), jnp.float32)

    # deterministic edge set: ring edges + skip-3 edges (no duplicates)
    src = jnp.concatenate([jnp.arange(N), jnp.arange(N)])
    dst = jnp.concatenate([(jnp.arange(N) + 1) % N, (jnp.arange(N) + 3) % N])
    edge_index = jnp.stack([src, dst]).astype(jnp.int32)     # [2, 2N]

    # GATConv(IN_DIM, OUT_DIM, heads=1) parameters, deterministic init
    w = jax.random.normal(k2, (OUT_DIM, IN_DIM), jnp.float32) * 0.3  # lin weight
    w_t = w.T                                                        # [IN, OUT]
    att_src = jax.random.normal(k3, (1, OUT_DIM), jnp.float32) * 0.3
    att_dst = jax.random.normal(k4, (1, OUT_DIM), jnp.float32) * 0.3
    bias = jax.random.normal(k5, (1, OUT_DIM), jnp.float32) * 0.1

    out = breadth_forward(x, edge_index, w_t, att_src, att_dst, bias)
    out = jax.block_until_ready(out)

    ref = breadth_ref(x, edge_index, w_t, att_src, att_dst, bias)
    assert out.shape == (N, OUT_DIM)
    # bf16 aggregation -> slightly relaxed tolerance vs the f32 reference.
    assert bool(jnp.allclose(out, ref, atol=3e-2, rtol=3e-2)), "mismatch vs reference"
    print("KERNEL_OK")
</pallas_src>

<mosaic_0001>
module attributes {stable_mosaic.version = 11 : i64} {
  func.func @_project_kernel(%arg0: i32, %arg1: memref<128x8xf32, #tpu.memory_space<vmem>>, %arg2: memref<8x128xf32, #tpu.memory_space<vmem>>, %arg3: memref<1x128xf32, #tpu.memory_space<vmem>>, %arg4: memref<1x128xf32, #tpu.memory_space<vmem>>, %arg5: memref<128x128xbf16, #tpu.memory_space<vmem>>, %arg6: memref<128x1xf32, #tpu.memory_space<vmem>>, %arg7: memref<128x1xf32, #tpu.memory_space<vmem>>) attributes {dimension_semantics = [#tpu.dimension_semantics<parallel>], iteration_bounds = array<i64: 1>, scalar_prefetch = 0 : i64, scratch_operands = 0 : i64, tpu.core_type = #tpu.core_type<tc>, window_params = [{transform_indices = @transform_0, window_bounds = array<i64: 128, 8>}, {pipeline_mode = #tpu.pipeline_mode<synchronous>, transform_indices = @transform_1, window_bounds = array<i64: 8, 128>}, {pipeline_mode = #tpu.pipeline_mode<synchronous>, transform_indices = @transform_2, window_bounds = array<i64: 1, 128>}, {pipeline_mode = #tpu.pipeline_mode<synchronous>, transform_indices = @transform_3, window_bounds = array<i64: 1, 128>}, {transform_indices = @transform_4, window_bounds = array<i64: 128, 128>}, {transform_indices = @transform_5, window_bounds = array<i64: 128, 1>}, {transform_indices = @transform_6, window_bounds = array<i64: 128, 1>}]} {
    %c0 = arith.constant 0 : index
    %c0_0 = arith.constant 0 : index
    %0 = vector.load %arg1[%c0, %c0_0] : memref<128x8xf32, #tpu.memory_space<vmem>>, vector<128x8xf32>
    %c0_1 = arith.constant 0 : index
    %c0_2 = arith.constant 0 : index
    %1 = vector.load %arg2[%c0_1, %c0_2] : memref<8x128xf32, #tpu.memory_space<vmem>>, vector<8x128xf32>
    %cst = arith.constant dense<0.000000e+00> : vector<128x128xf32>
    %2 = tpu.matmul %0, %1, %cst {dimension_numbers = #tpu.dot_dimension_numbers<[1], [0], [0], [1], [0, 0, 1, 1], [], []>} : vector<128x8xf32>, vector<8x128xf32>, vector<128x128xf32> -> vector<128x128xf32>
    %3 = arith.truncf %2 : vector<128x128xf32> to vector<128x128xbf16>
    %c0_3 = arith.constant 0 : index
    %c0_4 = arith.constant 0 : index
    %4 = vector.load %arg5[%c0_3, %c0_4] : memref<128x128xbf16, #tpu.memory_space<vmem>>, vector<128x128xbf16>
    tpu.vector_store %arg5[%c0_3, %c0_4], %3 {strides = array<i32>} : memref<128x128xbf16, #tpu.memory_space<vmem>>, vector<128x128xbf16>,
    %c0_5 = arith.constant 0 : index
    %c0_6 = arith.constant 0 : index
    %5 = vector.load %arg3[%c0_5, %c0_6] : memref<1x128xf32, #tpu.memory_space<vmem>>, vector<1x128xf32>
    %6 = vector.broadcast %5 : vector<1x128xf32> to vector<128x128xf32>
    %7 = arith.mulf %2, %6 : vector<128x128xf32>
    %cst_7 = arith.constant dense<0.000000e+00> : vector<128xf32>
    %8 = vector.multi_reduction <add>, %7, %cst_7 [1] : vector<128x128xf32> to vector<128xf32>
    %9 = vector.shape_cast %8 : vector<128xf32> to vector<128x1xf32>
    %c0_8 = arith.constant 0 : index
    %c0_9 = arith.constant 0 : index
    %10 = vector.load %arg6[%c0_8, %c0_9] : memref<128x1xf32, #tpu.memory_space<vmem>>, vector<128x1xf32>
    tpu.vector_store %arg6[%c0_8, %c0_9], %9 {strides = array<i32>} : memref<128x1xf32, #tpu.memory_space<vmem>>, vector<128x1xf32>,
    %c0_10 = arith.constant 0 : index
    %c0_11 = arith.constant 0 : index
    %11 = vector.load %arg4[%c0_10, %c0_11] : memref<1x128xf32, #tpu.memory_space<vmem>>, vector<1x128xf32>
    %12 = vector.broadcast %11 : vector<1x128xf32> to vector<128x128xf32>
    %13 = arith.mulf %2, %12 : vector<128x128xf32>
    %cst_12 = arith.constant dense<0.000000e+00> : vector<128xf32>
    %14 = vector.multi_reduction <add>, %13, %cst_12 [1] : vector<128x128xf32> to vector<128xf32>
    %15 = vector.shape_cast %14 : vector<128xf32> to vector<128x1xf32>
    %c0_13 = arith.constant 0 : index
    %c0_14 = arith.constant 0 : index
    %16 = vector.load %arg7[%c0_13, %c0_14] : memref<128x1xf32, #tpu.memory_space<vmem>>, vector<128x1xf32>
    tpu.vector_store %arg7[%c0_13, %c0_14], %15 {strides = array<i32>} : memref<128x1xf32, #tpu.memory_space<vmem>>, vector<128x1xf32>,
    return
  }
  func.func @transform_0(%arg0: i32) -> (i32, i32) {
    %c0_i32 = arith.constant 0 : i32
    %c0_i32_0 = arith.constant 0 : i32
    return %arg0, %c0_i32 : i32, i32
  }
  func.func @transform_1(%arg0: i32) -> (i32, i32) {
    %c0_i32 = arith.constant 0 : i32
    %c0_i32_0 = arith.constant 0 : i32
    %c0_i32_1 = arith.constant 0 : i32
    return %c0_i32, %c0_i32_0 : i32, i32
  }
  func.func @transform_2(%arg0: i32) -> (i32, i32) {
    %c0_i32 = arith.constant 0 : i32
    %c0_i32_0 = arith.constant 0 : i32
    %c0_i32_1 = arith.constant 0 : i32
    return %c0_i32, %c0_i32_0 : i32, i32
  }
  func.func @transform_3(%arg0: i32) -> (i32, i32) {
    %c0_i32 = arith.constant 0 : i32
    %c0_i32_0 = arith.constant 0 : i32
    %c0_i32_1 = arith.constant 0 : i32
    return %c0_i32, %c0_i32_0 : i32, i32
  }
  func.func @transform_4(%arg0: i32) -> (i32, i32) {
    %c0_i32 = arith.constant 0 : i32
    %c0_i32_0 = arith.constant 0 : i32
    return %arg0, %c0_i32 : i32, i32
  }
  func.func @transform_5(%arg0: i32) -> (i32, i32) {
    %c0_i32 = arith.constant 0 : i32
    %c0_i32_0 = arith.constant 0 : i32
    return %arg0, %c0_i32 : i32, i32
  }
  func.func @transform_6(%arg0: i32) -> (i32, i32) {
    %c0_i32 = arith.constant 0 : i32
    %c0_i32_0 = arith.constant 0 : i32
    return %arg0, %c0_i32 : i32, i32
  }
}

</mosaic_0001>

<llo_original>
// kernel: tpu_custom_call.1
$region0: #{tpu_custom_call.1}
  #allocation0 [shape = 'u32[]', space=smem, size = 0x4, offset = 0x4, fixed_abs, tag = 'smem constant byte address 0x4 - core index']
  #allocation1 [shape = 'u32[144,128]{1,0:T(1,128)}', space=vmem, size = 0x12000, scoped, tag = 'internal scratch']
  %s0 = inlined_call_operand.vmem [shape: f32[128,8], index: 0, kind: input, shape index: {}]
  %s1 = inlined_call_operand.vmem [shape: f32[8,128], index: 1, kind: input, shape index: {}]
  %s2 = inlined_call_operand.vmem [shape: f32[1,128], index: 2, kind: input, shape index: {}]
  %s3 = inlined_call_operand.vmem [shape: f32[1,128], index: 3, kind: input, shape index: {}]
  %s4 = inlined_call_operand.hbm [shape: bf16[128,128], index: 4, kind: output, shape index: {0}]
  %s5 = inlined_call_operand.vmem [shape: f32[128,1], index: 5, kind: output, shape index: {1}]
  %s6 = inlined_call_operand.vmem [shape: f32[128,1], index: 6, kind: output, shape index: {2}]
  %7 = xla_tuple %s4, %s5, %s6
  %s8 = sld [smem:[#allocation0]]
  $region42: #{tpu_custom_call.1} parent=0
    _
  %s10 = ssub.s32 1, %s8
  %s11 = scalar_select 0, %s10, %s8
  $region1: #{tpu_custom_call.1} parent=0
    #allocation2 [shape = 'u8[32768]{0}', space=vmem, size = 0x8000, scoped, tag = 'output window, operand 0, single buffered']
    #allocation3 [shape = 's32[1]{0}', space=sflag, size = 0x4, scoped, tag = 'scoped memory for tpu_custom_call.1']
    %12 = vsyncpa [#allocation3], 0
    // Predicated region
    $region2: #{tpu_custom_call.1} parent=1 // pred_check
      _
    $region3: #{tpu_custom_call.1} parent=1 // pred_check_branch
      %14 = sbr.rel (0) target = $region5
    $region4: #{tpu_custom_call.1} parent=1 // pred_region
      _
    $region5: #{tpu_custom_call.1} parent=1 // pred_fallthru
      _
    // Predicated region
    $region6: #{tpu_custom_call.1} parent=1 // pred_check
      _
    $region7: #{tpu_custom_call.1} parent=1 // pred_check_branch
      %16 = sbr.rel (0) target = $region9
    $region8: #{tpu_custom_call.1} parent=1 // pred_region
      _
    $region9: #{tpu_custom_call.1} parent=1 // pred_fallthru
      _
    // Predicated region
    $region10: #{tpu_custom_call.1} parent=1 // pred_check
      _
    $region11: #{tpu_custom_call.1} parent=1 // pred_check_branch
      %18 = sbr.rel (0) target = $region13
    $region12: #{tpu_custom_call.1} parent=1 // pred_region
      _
    $region13: #{tpu_custom_call.1} parent=1 // pred_fallthru
      _
    // Predicated region
    $region14: #{tpu_custom_call.1} parent=1 // pred_check
      _
    $region15: #{tpu_custom_call.1} parent=1 // pred_check_branch
      %20 = sbr.rel (0) target = $region17
    $region16: #{tpu_custom_call.1} parent=1 // pred_region
      _
    $region17: #{tpu_custom_call.1} parent=1 // pred_fallthru
      _
    %v21 = vld [vmem:[%s0] sm:$0xff]
    %v22 = vld [vmem:[%s0 + $0x8] sm:$0xff]
    %v23 = vld [vmem:[%s0 + $0x10] sm:$0xff]
    %v24 = vld [vmem:[%s0 + $0x18] sm:$0xff]
    %v25 = vld [vmem:[%s0 + $0x20] sm:$0xff]
    %v26 = vld [vmem:[%s0 + $0x28] sm:$0xff]
    %v27 = vld [vmem:[%s0 + $0x30] sm:$0xff]
    %v28 = vld [vmem:[%s0 + $0x38] sm:$0xff]
    %v29 = vld [vmem:[%s0 + $0x40] sm:$0xff]
    %v30 = vld [vmem:[%s0 + $0x48] sm:$0xff]
    %v31 = vld [vmem:[%s0 + $0x50] sm:$0xff]
    %v32 = vld [vmem:[%s0 + $0x58] sm:$0xff]
    %v33 = vld [vmem:[%s0 + $0x60] sm:$0xff]
    %v34 = vld [vmem:[%s0 + $0x68] sm:$0xff]
    %v35 = vld [vmem:[%s0 + $0x70] sm:$0xff]
    %v36 = vld [vmem:[%s0 + $0x78] sm:$0xff]
    %v37 = vld [vmem:[%s1] sm:$0xff]
    %vm38 = vcmask 64512
    %v40 = vsel %vm38, %v21, 0
    %v43 = vsel %vm38, %v22, 0
    %v46 = vsel %vm38, %v23, 0
    %v49 = vsel %vm38, %v24, 0
    %v52 = vsel %vm38, %v25, 0
    %v55 = vsel %vm38, %v26, 0
    %v58 = vsel %vm38, %v27, 0
    %v61 = vsel %vm38, %v28, 0
    %v64 = vsel %vm38, %v29, 0
    %v67 = vsel %vm38, %v30, 0
    %v70 = vsel %vm38, %v31, 0
    %v73 = vsel %vm38, %v32, 0
    %v76 = vsel %vm38, %v33, 0
    %v79 = vsel %vm38, %v34, 0
    %v82 = vsel %vm38, %v35, 0
    %v85 = vsel %vm38, %v36, 0
    %87 = vmatprep.subr.mxu0 0.0
    %88 = vmatpush1.msra.mxu0 %v37
    %89 = vmatprep.subr.mxu0 0.0
    %90 = vmatpush1.msra.mxu0 0.0
    %91 = vmatprep.subr.mxu0 0.0
    %92 = vmatpush1.msra.mxu0 0.0
    %93 = vmatprep.subr.mxu0 0.0
    %94 = vmatpush1.msra.mxu0 0.0
    %95 = vmatprep.subr.mxu0 0.0
    %96 = vmatpush1.msra.mxu0 0.0
    %97 = vmatprep.subr.mxu0 0.0
    %98 = vmatpush1.msra.mxu0 0.0
    %99 = vmatprep.subr.mxu0 0.0
    %100 = vmatpush1.msra.mxu0 0.0
    %101 = vmatprep.subr.mxu0 0.0
    %102 = vmatpush1.msra.mxu0 0.0
    %103 = vmatprep.subr.mxu0 0.0
    %104 = vmatpush1.msra.mxu0 0.0
    %105 = vmatprep.subr.mxu0 0.0
    %106 = vmatpush1.msra.mxu0 0.0
    %107 = vmatprep.subr.mxu0 0.0
    %108 = vmatpush1.msra.mxu0 0.0
    %109 = vmatprep.subr.mxu0 0.0
    %110 = vmatpush1.msra.mxu0 0.0
    %111 = vmatprep.subr.mxu0 0.0
    %112 = vmatpush1.msra.mxu0 0.0
    %113 = vmatprep.subr.mxu0 0.0
    %114 = vmatpush1.msra.mxu0 0.0
    %115 = vmatprep.subr.mxu0 0.0
    %116 = vmatpush1.msra.mxu0 0.0
    %117 = vmatprep.subr.mxu0 0.0
    %118 = vmatpush1.msra.mxu0 0.0
    %119 = vmatprep.subr.mxu0 0.0
    %120 = vmatpush1.msra.mxu0 0.0
    %121 = vmatprep.subr.mxu0 0.0
    %122 = vmatpush1.msra.mxu0 0.0
    %123 = vmatprep.subr.mxu0 0.0
    %124 = vmatpush1.msra.mxu0 0.0
    %125 = vmatprep.subr.mxu0 0.0
    %126 = vmatpush1.msra.mxu0 0.0
    %127 = vmatprep.subr.mxu0 0.0
    %128 = vmatpush1.msra.mxu0 0.0
    %129 = vmatprep.subr.mxu0 0.0
    %130 = vmatpush1.msra.mxu0 0.0
    %131 = vmatprep.subr.mxu0 0.0
    %132 = vmatpush1.msra.mxu0 0.0
    %133 = vmatprep.subr.mxu0 0.0
    %134 = vmatpush1.msra.mxu0 0.0
    %135 = vmatprep.subr.mxu0 0.0
    %136 = vmatpush1.msra.mxu0 0.0
    %137 = vmatprep.subr.mxu0 0.0
    %138 = vmatpush1.msra.mxu0 0.0
    %139 = vmatprep.subr.mxu0 0.0
    %140 = vmatpush1.msra.mxu0 0.0
    %141 = vmatprep.subr.mxu0 0.0
    %142 = vmatpush1.msra.mxu0 0.0
    %143 = vmatprep.subr.mxu0 0.0
    %144 = vmatpush1.msra.mxu0 0.0
    %145 = vmatprep.subr.mxu0 0.0
    %146 = vmatpush1.msra.mxu0 0.0
    %147 = vmatprep.subr.mxu0 0.0
    %148 = vmatpush1.msra.mxu0 0.0
    %149 = vmatprep.subr.mxu0 0.0
    %150 = vmatpush1.msra.mxu0 0.0
    %151 = vmatprep.mubr.f32.mxu0 0.0
    %152 = vmatmul.mubr.f32.gmra.mrb[0].mxu0 %v40
    %v153 = vpop.f32.mrb[0].mxu0
    %v154 = vadd.f32 0.0, %v153
    %v155 = vpop.f32.mrb[0].mxu0
    %156 = vmatprep.mubr.f32.mxu0 0.0
    %157 = vmatmul.mubr.f32.gmra.mrb[0].mxu0 %v43
    %v158 = vpop.f32.mrb[0].mxu0
    %v159 = vadd.f32 0.0, %v158
    %v160 = vpop.f32.mrb[0].mxu0
    %161 = vmatprep.mubr.f32.mxu0 0.0
    %162 = vmatmul.mubr.f32.gmra.mrb[0].mxu0 %v46
    %v163 = vpop.f32.mrb[0].mxu0
    %v164 = vadd.f32 0.0, %v163
    %v165 = vpop.f32.mrb[0].mxu0
    %166 = vmatprep.mubr.f32.mxu0 0.0
    %167 = vmatmul.mubr.f32.gmra.mrb[0].mxu0 %v49
    %v168 = vpop.f32.mrb[0].mxu0
    %v169 = vadd.f32 0.0, %v168
    %v170 = vpop.f32.mrb[0].mxu0
    %171 = vmatprep.mubr.f32.mxu0 0.0
    %172 = vmatmul.mubr.f32.gmra.mrb[0].mxu0 %v52
    %v173 = vpop.f32.mrb[0].mxu0
    %v174 = vadd.f32 0.0, %v173
    %v175 = vpop.f32.mrb[0].mxu0
    %176 = vmatprep.mubr.f32.mxu0 0.0
    %177 = vmatmul.mubr.f32.gmra.mrb[0].mxu0 %v55
    %v178 = vpop.f32.mrb[0].mxu0
    %v179 = vadd.f32 0.0, %v178
    %v180 = vpop.f32.mrb[0].mxu0
    %181 = vmatprep.mubr.f32.mxu0 0.0
    %182 = vmatmul.mubr.f32.gmra.mrb[0].mxu0 %v58
    %v183 = vpop.f32.mrb[0].mxu0
    %v184 = vadd.f32 0.0, %v183
    %v185 = vpop.f32.mrb[0].mxu0
    %186 = vmatprep.mubr.f32.mxu0 0.0
    %187 = vmatmul.mubr.f32.gmra.mrb[0].mxu0 %v61
    %v188 = vpop.f32.mrb[0].mxu0
    %v189 = vadd.f32 0.0, %v188
    %v190 = vpop.f32.mrb[0].mxu0
    %191 = vmatprep.mubr.f32.mxu0 0.0
    %192 = vmatmul.mubr.f32.gmra.mrb[0].mxu0 %v64
    %v193 = vpop.f32.mrb[0].mxu0
    %v194 = vadd.f32 0.0, %v193
    %v195 = vpop.f32.mrb[0].mxu0
    %196 = vmatprep.mubr.f32.mxu0 0.0
    %197 = vmatmul.mubr.f32.gmra.mrb[0].mxu0 %v67
    %v198 = vpop.f32.mrb[0].mxu0
    %v199 = vadd.f32 0.0, %v198
    %v200 = vpop.f32.mrb[0].mxu0
    %201 = vmatprep.mubr.f32.mxu0 0.0
    %202 = vmatmul.mubr.f32.gmra.mrb[0].mxu0 %v70
    %v203 = vpop.f32.mrb[0].mxu0
    %v204 = vadd.f32 0.0, %v203
    %v205 = vpop.f32.mrb[0].mxu0
    %206 = vmatprep.mubr.f32.mxu0 0.0
    %207 = vmatmul.mubr.f32.gmra.mrb[0].mxu0 %v73
    %v208 = vpop.f32.mrb[0].mxu0
    %v209 = vadd.f32 0.0, %v208
    %v210 = vpop.f32.mrb[0].mxu0
    %211 = vmatprep.mubr.f32.mxu0 0.0
    %212 = vmatmul.mubr.f32.gmra.mrb[0].mxu0 %v76
    %v213 = vpop.f32.mrb[0].mxu0
    %v214 = vadd.f32 0.0, %v213
    %v215 = vpop.f32.mrb[0].mxu0
    %216 = vmatprep.mubr.f32.mxu0 0.0
    %217 = vmatmul.mubr.f32.gmra.mrb[0].mxu0 %v79
    %v218 = vpop.f32.mrb[0].mxu0
    %v219 = vadd.f32 0.0, %v218
    %v220 = vpop.f32.mrb[0].mxu0
    %221 = vmatprep.mubr.f32.mxu0 0.0
    %222 = vmatmul.mubr.f32.gmra.mrb[0].mxu0 %v82
    %v223 = vpop.f32.mrb[0].mxu0
    %v224 = vadd.f32 0.0, %v223
    %v225 = vpop.f32.mrb[0].mxu0
    %226 = vmatprep.mubr.f32.mxu0 0.0
    %227 = vmatmul.mubr.f32.gmra.mrb[0].mxu0 %v85
    %v228 = vpop.f32.mrb[0].mxu0
    %v229 = vadd.f32 0.0, %v228
    %v230 = vpop.f32.mrb[0].mxu0
    %231 = vdwg.mxu0
    %v232 = vpack.c.bf16 %v159, %v154
    %v233 = vpack.c.bf16 %v169, %v164
    %v234 = vpack.c.bf16 %v179, %v174
    %v235 = vpack.c.bf16 %v189, %v184
    %v236 = vpack.c.bf16 %v199, %v194
    %v237 = vpack.c.bf16 %v209, %v204
    %v238 = vpack.c.bf16 %v219, %v214
    %v239 = vpack.c.bf16 %v229, %v224
    %v248 = vunpack.c.l.b16 %v232
    %v249 = vunpack.c.h.b16 %v232
    %v250 = vunpack.c.l.b16 %v233
    %v251 = vunpack.c.h.b16 %v233
    %v252 = vunpack.c.l.b16 %v234
    %v253 = vunpack.c.h.b16 %v234
    %v254 = vunpack.c.l.b16 %v235
    %v255 = vunpack.c.h.b16 %v235
    %v256 = vunpack.c.l.b16 %v236
    %v257 = vunpack.c.h.b16 %v236
    %v258 = vunpack.c.l.b16 %v237
    %v259 = vunpack.c.h.b16 %v237
    %v260 = vunpack.c.l.b16 %v238
    %v261 = vunpack.c.h.b16 %v238
    %v262 = vunpack.c.l.b16 %v239
    %v263 = vunpack.c.h.b16 %v239
    %v264 = vpack.c.b16 %v248, %v248
    %v265 = vpack.c.b16 %v249, %v249
    %v266 = vpack.c.b16 %v250, %v250
    %v267 = vpack.c.b16 %v251, %v251
    %v268 = vpack.c.b16 %v252, %v252
    %v269 = vpack.c.b16 %v253, %v253
    %v270 = vpack.c.b16 %v254, %v254
    %v271 = vpack.c.b16 %v255, %v255
    %v272 = vpack.c.b16 %v256, %v256
    %v273 = vpack.c.b16 %v257, %v257
    %v274 = vpack.c.b16 %v258, %v258
    %v275 = vpack.c.b16 %v259, %v259
    %v276 = vpack.c.b16 %v260, %v260
    %v277 = vpack.c.b16 %v261, %v261
    %v278 = vpack.c.b16 %v262, %v262
    %v279 = vpack.c.b16 %v263, %v263
    %296 = vst [vmem:[#allocation2] sm:$0xf] %v264
    %297 = vst [vmem:[#allocation2 + $0x4] sm:$0xf] %v265
    %298 = vst [vmem:[#allocation2 + $0x8] sm:$0xf] %v266
    %299 = vst [vmem:[#allocation2 + $0xc] sm:$0xf] %v267
    %300 = vst [vmem:[#allocation2 + $0x10] sm:$0xf] %v268
    %301 = vst [vmem:[#allocation2 + $0x14] sm:$0xf] %v269
    %302 = vst [vmem:[#allocation2 + $0x18] sm:$0xf] %v270
    %303 = vst [vmem:[#allocation2 + $0x1c] sm:$0xf] %v271
    %304 = vst [vmem:[#allocation2 + $0x20] sm:$0xf] %v272
    %305 = vst [vmem:[#allocation2 + $0x24] sm:$0xf] %v273
    %306 = vst [vmem:[#allocation2 + $0x28] sm:$0xf] %v274
    %307 = vst [vmem:[#allocation2 + $0x2c] sm:$0xf] %v275
    %308 = vst [vmem:[#allocation2 + $0x30] sm:$0xf] %v276
    %309 = vst [vmem:[#allocation2 + $0x34] sm:$0xf] %v277
    %310 = vst [vmem:[#allocation2 + $0x38] sm:$0xf] %v278
    %311 = vst [vmem:[#allocation2 + $0x3c] sm:$0xf] %v279
    %v312 = vld [vmem:[%s2] sm:$0x1]
    %v314 = vlaneseq
    %v315 = vshrl.u32 %v314, 7
    %v316 = vsub.s32 0, %v315
    %v317 = vrot.slane %v312, %v316
    %v319 = vmul.f32 %v154, %v317
    %v320 = vmul.f32 %v159, %v317
    %v321 = vmul.f32 %v164, %v317
    %v322 = vmul.f32 %v169, %v317
    %v323 = vmul.f32 %v174, %v317
    %v324 = vmul.f32 %v179, %v317
    %v325 = vmul.f32 %v184, %v317
    %v326 = vmul.f32 %v189, %v317
    %v327 = vmul.f32 %v194, %v317
    %v328 = vmul.f32 %v199, %v317
    %v329 = vmul.f32 %v204, %v317
    %v330 = vmul.f32 %v209, %v317
    %v331 = vmul.f32 %v214, %v317
    %v332 = vmul.f32 %v219, %v317
    %v333 = vmul.f32 %v224, %v317
    %v334 = vmul.f32 %v229, %v317
    %335 = vadd.xlane.f32.xlu0 %v319
    %v336 = vpop.xlane.xlu0 %335
    %337 = vadd.xlane.f32.xlu0 %v320
    %v338 = vpop.xlane.xlu0 %337
    %339 = vadd.xlane.f32.xlu0 %v321
    %v340 = vpop.xlane.xlu0 %339
    %341 = vadd.xlane.f32.xlu0 %v322
    %v342 = vpop.xlane.xlu0 %341
    %343 = vadd.xlane.f32.xlu0 %v323
    %v344 = vpop.xlane.xlu0 %343
    %345 = vadd.xlane.f32.xlu0 %v324
    %v346 = vpop.xlane.xlu0 %345
    %347 = vadd.xlane.f32.xlu0 %v325
    %v348 = vpop.xlane.xlu0 %347
    %349 = vadd.xlane.f32.xlu0 %v326
    %v350 = vpop.xlane.xlu0 %349
    %351 = vadd.xlane.f32.xlu0 %v327
    %v352 = vpop.xlane.xlu0 %351
    %353 = vadd.xlane.f32.xlu0 %v328
    %v354 = vpop.xlane.xlu0 %353
    %355 = vadd.xlane.f32.xlu0 %v329
    %v356 = vpop.xlane.xlu0 %355
    %357 = vadd.xlane.f32.xlu0 %v330
    %v358 = vpop.xlane.xlu0 %357
    %359 = vadd.xlane.f32.xlu0 %v331
    %v360 = vpop.xlane.xlu0 %359
    %361 = vadd.xlane.f32.xlu0 %v332
    %v362 = vpop.xlane.xlu0 %361
    %363 = vadd.xlane.f32.xlu0 %v333
    %v364 = vpop.xlane.xlu0 %363
    %365 = vadd.xlane.f32.xlu0 %v334
    %v366 = vpop.xlane.xlu0 %365
    %vm367 = vcmask 7168
    %368 = vst.msk [vmem:[%s5] sm:$0xff] %vm367, %v336
    %369 = vst.msk [vmem:[%s5 + $0x8] sm:$0xff] %vm367, %v338
    %370 = vst.msk [vmem:[%s5 + $0x10] sm:$0xff] %vm367, %v340
    %371 = vst.msk [vmem:[%s5 + $0x18] sm:$0xff] %vm367, %v342
    %372 = vst.msk [vmem:[%s5 + $0x20] sm:$0xff] %vm367, %v344
    %373 = vst.msk [vmem:[%s5 + $0x28] sm:$0xff] %vm367, %v346
    %374 = vst.msk [vmem:[%s5 + $0x30] sm:$0xff] %vm367, %v348
    %375 = vst.msk [vmem:[%s5 + $0x38] sm:$0xff] %vm367, %v350
    %376 = vst.msk [vmem:[%s5 + $0x40] sm:$0xff] %vm367, %v352
    %377 = vst.msk [vmem:[%s5 + $0x48] sm:$0xff] %vm367, %v354
    %378 = vst.msk [vmem:[%s5 + $0x50] sm:$0xff] %vm367, %v356
    %379 = vst.msk [vmem:[%s5 + $0x58] sm:$0xff] %vm367, %v358
    %380 = vst.msk [vmem:[%s5 + $0x60] sm:$0xff] %vm367, %v360
    %381 = vst.msk [vmem:[%s5 + $0x68] sm:$0xff] %vm367, %v362
    %382 = vst.msk [vmem:[%s5 + $0x70] sm:$0xff] %vm367, %v364
    %383 = vst.msk [vmem:[%s5 + $0x78] sm:$0xff] %vm367, %v366
    %v384 = vld [vmem:[%s3] sm:$0x1]
    %v386 = vlaneseq
    %v387 = vshrl.u32 %v386, 7
    %v388 = vsub.s32 0, %v387
    %v389 = vrot.slane %v384, %v388
    %v391 = vmul.f32 %v154, %v389
    %v392 = vmul.f32 %v159, %v389
    %v393 = vmul.f32 %v164, %v389
    %v394 = vmul.f32 %v169, %v389
    %v395 = vmul.f32 %v174, %v389
    %v396 = vmul.f32 %v179, %v389
    %v397 = vmul.f32 %v184, %v389
    %v398 = vmul.f32 %v189, %v389
    %v399 = vmul.f32 %v194, %v389
    %v400 = vmul.f32 %v199, %v389
    %v401 = vmul.f32 %v204, %v389
    %v402 = vmul.f32 %v209, %v389
    %v403 = vmul.f32 %v214, %v389
    %v404 = vmul.f32 %v219, %v389
    %v405 = vmul.f32 %v224, %v389
    %v406 = vmul.f32 %v229, %v389
    %407 = vadd.xlane.f32.xlu0 %v391
    %v408 = vpop.xlane.xlu0 %407
    %409 = vadd.xlane.f32.xlu0 %v392
    %v410 = vpop.xlane.xlu0 %409
    %411 = vadd.xlane.f32.xlu0 %v393
    %v412 = vpop.xlane.xlu0 %411
    %413 = vadd.xlane.f32.xlu0 %v394
    %v414 = vpop.xlane.xlu0 %413
    %415 = vadd.xlane.f32.xlu0 %v395
    %v416 = vpop.xlane.xlu0 %415
    %417 = vadd.xlane.f32.xlu0 %v396
    %v418 = vpop.xlane.xlu0 %417
    %419 = vadd.xlane.f32.xlu0 %v397
    %v420 = vpop.xlane.xlu0 %419
    %421 = vadd.xlane.f32.xlu0 %v398
    %v422 = vpop.xlane.xlu0 %421
    %423 = vadd.xlane.f32.xlu0 %v399
    %v424 = vpop.xlane.xlu0 %423
    %425 = vadd.xlane.f32.xlu0 %v400
    %v426 = vpop.xlane.xlu0 %425
    %427 = vadd.xlane.f32.xlu0 %v401
    %v428 = vpop.xlane.xlu0 %427
    %429 = vadd.xlane.f32.xlu0 %v402
    %v430 = vpop.xlane.xlu0 %429
    %431 = vadd.xlane.f32.xlu0 %v403
    %v432 = vpop.xlane.xlu0 %431
    %433 = vadd.xlane.f32.xlu0 %v404
    %v434 = vpop.xlane.xlu0 %433
    %435 = vadd.xlane.f32.xlu0 %v405
    %v436 = vpop.xlane.xlu0 %435
    %437 = vadd.xlane.f32.xlu0 %v406
    %v438 = vpop.xlane.xlu0 %437
    %439 = vst.msk [vmem:[%s6] sm:$0xff] %vm367, %v408
    %440 = vst.msk [vmem:[%s6 + $0x8] sm:$0xff] %vm367, %v410
    %441 = vst.msk [vmem:[%s6 + $0x10] sm:$0xff] %vm367, %v412
    %442 = vst.msk [vmem:[%s6 + $0x18] sm:$0xff] %vm367, %v414
    %443 = vst.msk [vmem:[%s6 + $0x20] sm:$0xff] %vm367, %v416
    %444 = vst.msk [vmem:[%s6 + $0x28] sm:$0xff] %vm367, %v418
    %445 = vst.msk [vmem:[%s6 + $0x30] sm:$0xff] %vm367, %v420
    %446 = vst.msk [vmem:[%s6 + $0x38] sm:$0xff] %vm367, %v422
    %447 = vst.msk [vmem:[%s6 + $0x40] sm:$0xff] %vm367, %v424
    %448 = vst.msk [vmem:[%s6 + $0x48] sm:$0xff] %vm367, %v426
    %449 = vst.msk [vmem:[%s6 + $0x50] sm:$0xff] %vm367, %v428
    %450 = vst.msk [vmem:[%s6 + $0x58] sm:$0xff] %vm367, %v430
    %451 = vst.msk [vmem:[%s6 + $0x60] sm:$0xff] %vm367, %v432
    %452 = vst.msk [vmem:[%s6 + $0x68] sm:$0xff] %vm367, %v434
    %453 = vst.msk [vmem:[%s6 + $0x70] sm:$0xff] %vm367, %v436
    %454 = vst.msk [vmem:[%s6 + $0x78] sm:$0xff] %vm367, %v438
    // Predicated region
    $region18: #{tpu_custom_call.1} parent=1 // pred_check
      _
    $region19: #{tpu_custom_call.1} parent=1 // pred_check_branch
      %456 = sbr.rel (0) target = $region21
    $region20: #{tpu_custom_call.1} parent=1 // pred_region
      %s458 = ssub.s32 1024, 1024
      %459 = vsyncadd [#allocation3], %s458
      %s460 = sshll.u32 [#allocation2], 4
      %s461 = int_to_ptr.vmem [resolvable:$true] %s460
      %466 = dma.vmem_to_hbm [thread:$0]  %s461, 1024, %s4, [#allocation3], 64, 64, 4
    $region21: #{tpu_custom_call.1} parent=1 // pred_fallthru
      _
    // Predicated region
    $region22: #{tpu_custom_call.1} parent=1 // pred_check
      _
    $region23: #{tpu_custom_call.1} parent=1 // pred_check_branch
      %468 = sbr.rel (0) target = $region25
    $region24: #{tpu_custom_call.1} parent=1 // pred_region
      _
    $region25: #{tpu_custom_call.1} parent=1 // pred_fallthru
      _
    // Predicated region
    $region26: #{tpu_custom_call.1} parent=1 // pred_check
      _
    $region27: #{tpu_custom_call.1} parent=1 // pred_check_branch
      %470 = sbr.rel (0) target = $region29
    $region28: #{tpu_custom_call.1} parent=1 // pred_region
      _
    $region29: #{tpu_custom_call.1} parent=1 // pred_fallthru
      _
    // Predicated region
    $region30: #{tpu_custom_call.1} parent=1 // pred_check
      _
    $region31: #{tpu_custom_call.1} parent=1 // pred_check_branch
      %472 = sbr.rel (0) target = $region33
    $region32: #{tpu_custom_call.1} parent=1 // pred_region
      %473 = dma.done [#allocation3], 1024
    $region33: #{tpu_custom_call.1} parent=1 // pred_fallthru
      _
    // Predicated region
    $region34: #{tpu_custom_call.1} parent=1 // pred_check
      _
    $region35: #{tpu_custom_call.1} parent=1 // pred_check_branch
      %475 = sbr.rel (0) target = $region37
    $region36: #{tpu_custom_call.1} parent=1 // pred_region
      _
    $region37: #{tpu_custom_call.1} parent=1 // pred_fallthru
      _
    // Predicated region
    $region38: #{tpu_custom_call.1} parent=1 // pred_check
      _
    $region39: #{tpu_custom_call.1} parent=1 // pred_check_branch
      %477 = sbr.rel (0) target = $region41
    $region40: #{tpu_custom_call.1} parent=1 // pred_region
      _
    $region41: #{tpu_custom_call.1} parent=1 // pred_fallthru
      _
    %478 = vsyncpa [#allocation3], 1

</llo_original>
